<compile_context>
chip_gen: v6e
topology: v6e:2x2x1
jax: 0.10.0
libtpu: 0.0.40
codegen_flags: <defaults>
</compile_context>

<pallas_src>
import jax
import jax.numpy as jnp
from jax.experimental import pallas as pl
from jax.experimental.pallas import tpu as pltpu


def _emitter_kernel(r_ref, w_ref, b_ref, out_ref):
    """out = r @ W + b   (W stored as [encoding_dim, out_dim])."""
    out_ref[...] = (
        jnp.dot(r_ref[...], w_ref[...], preferred_element_type=jnp.float32)
        + b_ref[...]
    ).astype(out_ref.dtype)


def init_emitter_params(key, encoding_dim, design_dim):
    """design_dim is a (n, p) tuple as in the reference module; out = design_dim[1].
    The weight is stored transposed ([in, out]) so the kernel issues r @ W directly
    (equivalent to PyTorch's r @ W^T with W: [out, in])."""
    out_dim = design_dim[1]
    kw, kb = jax.random.split(key, 2)
    bound = float(1.0 / (encoding_dim ** 0.5))      # nn.Linear default init range
    w = jax.random.uniform(kw, (encoding_dim, out_dim), jnp.float32, -bound, bound)
    b = jax.random.uniform(kb, (1, out_dim), jnp.float32, -bound, bound)
    return {"w": w, "b": b}


def emitter_forward(params, r, *, batch_tile=1024):
    """r: [..., encoding_dim] -> [..., design_dim[1]]  (single Linear layer)."""
    w, b = params["w"], params["b"]
    E, out_dim = w.shape
    lead = r.shape[:-1]
    r2 = r.reshape((-1, E))                 # flatten leading dims into matmul M (free)
    B = r2.shape[0]

    # Whole batch in one block when small; otherwise tile B (multiple of 8) along a
    # single "parallel" grid axis.  Last block dims are full-extent, so the TPU
    # (8,128) block rule is satisfied in both cases.
    if B <= batch_tile or B % 8 != 0:
        tb, grid = B, (1,)
    else:
        tb = batch_tile
        while B % tb != 0:
            tb //= 2
        tb = max(tb, 8)
        grid = (B // tb,)

    full = lambda shape: pl.BlockSpec(shape, lambda i: (0,) * len(shape))

    out2 = pl.pallas_call(
        _emitter_kernel,
        out_shape=jax.ShapeDtypeStruct((B, out_dim), r.dtype),
        grid_spec=pltpu.PrefetchScalarGridSpec(
            num_scalar_prefetch=0,
            grid=grid,
            in_specs=[
                pl.BlockSpec((tb, E), lambda i: (i, 0)),   # r tile
                full((E, out_dim)),                        # weight (constant block)
                full((1, out_dim)),                        # bias   (constant block)
            ],
            out_specs=pl.BlockSpec((tb, out_dim), lambda i: (i, 0)),
        ),
        compiler_params=pltpu.CompilerParams(
            dimension_semantics=("parallel",)),
    )(r2, w, b)

    return out2.reshape(lead + (out_dim,))


def emitter_forward_ref(params, r):
    """Pure-JAX reference (== PyTorch self.linear(r))."""
    return r @ params["w"] + params["b"]


if __name__ == "__main__":
    # Small shapes consistent with the module: batch=2, encoding_dim=32,
    # design_dim=(1, 4) -> out_features = 4.
    B = 2
    encoding_dim = 32
    design_dim = (1, 4)

    key = jax.random.PRNGKey(0)
    kp, kr = jax.random.split(key)
    params = init_emitter_params(kp, encoding_dim, design_dim)
    r = jax.random.normal(kr, (B, encoding_dim), jnp.float32)

    out = emitter_forward(params, r)
    out = jax.block_until_ready(out)

    ref = emitter_forward_ref(params, r)
    assert out.shape == (B, design_dim[1])
    assert jnp.allclose(out, ref, atol=1e-5, rtol=1e-5), "mismatch vs reference"

    print("KERNEL_OK")
</pallas_src>

<mosaic_0001>
module attributes {stable_mosaic.version = 11 : i64} {
  func.func @_emitter_kernel(%arg0: i32, %arg1: memref<2x32xf32, #tpu.memory_space<vmem>>, %arg2: memref<32x4xf32, #tpu.memory_space<vmem>>, %arg3: memref<1x4xf32, #tpu.memory_space<vmem>>, %arg4: memref<2x4xf32, #tpu.memory_space<vmem>>) attributes {dimension_semantics = [#tpu.dimension_semantics<parallel>], iteration_bounds = array<i64: 1>, scalar_prefetch = 0 : i64, scratch_operands = 0 : i64, tpu.core_type = #tpu.core_type<tc>, window_params = [{transform_indices = @transform_0, window_bounds = array<i64: 2, 32>}, {pipeline_mode = #tpu.pipeline_mode<synchronous>, transform_indices = @transform_1, window_bounds = array<i64: 32, 4>}, {pipeline_mode = #tpu.pipeline_mode<synchronous>, transform_indices = @transform_2, window_bounds = array<i64: 1, 4>}, {transform_indices = @transform_3, window_bounds = array<i64: 2, 4>}]} {
    %c0 = arith.constant 0 : index
    %c0_0 = arith.constant 0 : index
    %0 = vector.load %arg1[%c0, %c0_0] : memref<2x32xf32, #tpu.memory_space<vmem>>, vector<2x32xf32>
    %c0_1 = arith.constant 0 : index
    %c0_2 = arith.constant 0 : index
    %1 = vector.load %arg2[%c0_1, %c0_2] : memref<32x4xf32, #tpu.memory_space<vmem>>, vector<32x4xf32>
    %cst = arith.constant dense<0.000000e+00> : vector<2x4xf32>
    %2 = tpu.matmul %0, %1, %cst {dimension_numbers = #tpu.dot_dimension_numbers<[1], [0], [0], [1], [0, 0, 1, 1], [], []>} : vector<2x32xf32>, vector<32x4xf32>, vector<2x4xf32> -> vector<2x4xf32>
    %c0_3 = arith.constant 0 : index
    %c0_4 = arith.constant 0 : index
    %3 = vector.load %arg3[%c0_3, %c0_4] : memref<1x4xf32, #tpu.memory_space<vmem>>, vector<1x4xf32>
    %4 = vector.broadcast %3 : vector<1x4xf32> to vector<2x4xf32>
    %5 = arith.addf %2, %4 : vector<2x4xf32>
    %c0_5 = arith.constant 0 : index
    %c0_6 = arith.constant 0 : index
    %6 = vector.load %arg4[%c0_5, %c0_6] : memref<2x4xf32, #tpu.memory_space<vmem>>, vector<2x4xf32>
    tpu.vector_store %arg4[%c0_5, %c0_6], %5 {strides = array<i32>} : memref<2x4xf32, #tpu.memory_space<vmem>>, vector<2x4xf32>,
    return
  }
  func.func @transform_0(%arg0: i32) -> (i32, i32) {
    %c0_i32 = arith.constant 0 : i32
    %c0_i32_0 = arith.constant 0 : i32
    return %arg0, %c0_i32 : i32, i32
  }
  func.func @transform_1(%arg0: i32) -> (i32, i32) {
    %c0_i32 = arith.constant 0 : i32
    %c0_i32_0 = arith.constant 0 : i32
    %c0_i32_1 = arith.constant 0 : i32
    return %c0_i32, %c0_i32_0 : i32, i32
  }
  func.func @transform_2(%arg0: i32) -> (i32, i32) {
    %c0_i32 = arith.constant 0 : i32
    %c0_i32_0 = arith.constant 0 : i32
    %c0_i32_1 = arith.constant 0 : i32
    return %c0_i32, %c0_i32_0 : i32, i32
  }
  func.func @transform_3(%arg0: i32) -> (i32, i32) {
    %c0_i32 = arith.constant 0 : i32
    %c0_i32_0 = arith.constant 0 : i32
    return %arg0, %c0_i32 : i32, i32
  }
}

</mosaic_0001>

<llo_original>
// kernel: tpu_custom_call.1
$region0: #{tpu_custom_call.1}
  #allocation0 [shape = 'u32[]', space=smem, size = 0x4, offset = 0x4, fixed_abs, tag = 'smem constant byte address 0x4 - core index']
  #allocation1 [shape = 'u32[144,128]{1,0:T(1,128)}', space=vmem, size = 0x12000, scoped, tag = 'internal scratch']
  %s0 = inlined_call_operand.vmem [shape: f32[2,32], index: 0, kind: input, shape index: {}]
  %s1 = inlined_call_operand.vmem [shape: f32[32,4], index: 1, kind: input, shape index: {}]
  %s2 = inlined_call_operand.vmem [shape: f32[1,4], index: 2, kind: input, shape index: {}]
  %s3 = inlined_call_operand.hbm [shape: f32[2,4], index: 3, kind: output, shape index: {}]
  %s4 = sld [smem:[#allocation0]]
  $region22: #{tpu_custom_call.1} parent=0
    _
  %s6 = ssub.s32 1, %s4
  %s7 = scalar_select 0, %s6, %s4
  $region1: #{tpu_custom_call.1} parent=0
    #allocation2 [shape = 'u8[1024]{0}', space=vmem, size = 0x400, scoped, tag = 'output window, operand 0, single buffered']
    #allocation3 [shape = 's32[1]{0}', space=sflag, size = 0x4, scoped, tag = 'scoped memory for tpu_custom_call.1']
    %8 = vsyncpa [#allocation3], 0
    // Predicated region
    $region2: #{tpu_custom_call.1} parent=1 // pred_check
      _
    $region3: #{tpu_custom_call.1} parent=1 // pred_check_branch
      %10 = sbr.rel (0) target = $region5
    $region4: #{tpu_custom_call.1} parent=1 // pred_region
      _
    $region5: #{tpu_custom_call.1} parent=1 // pred_fallthru
      _
    // Predicated region
    $region6: #{tpu_custom_call.1} parent=1 // pred_check
      _
    $region7: #{tpu_custom_call.1} parent=1 // pred_check_branch
      %12 = sbr.rel (0) target = $region9
    $region8: #{tpu_custom_call.1} parent=1 // pred_region
      _
    $region9: #{tpu_custom_call.1} parent=1 // pred_fallthru
      _
    // Predicated region
    $region10: #{tpu_custom_call.1} parent=1 // pred_check
      _
    $region11: #{tpu_custom_call.1} parent=1 // pred_check_branch
      %14 = sbr.rel (0) target = $region13
    $region12: #{tpu_custom_call.1} parent=1 // pred_region
      _
    $region13: #{tpu_custom_call.1} parent=1 // pred_fallthru
      _
    %v15 = vld [vmem:[%s0] sm:$0x3]
    %v16 = vld [vmem:[%s1] sm:$0xff]
    %v17 = vld [vmem:[%s1 + $0x8] sm:$0xff]
    %v18 = vld [vmem:[%s1 + $0x10] sm:$0xff]
    %v19 = vld [vmem:[%s1 + $0x18] sm:$0xff]
    %v20 = vld [vmem:[%s2] sm:$0x1]
    %v22 = vlaneseq
    %v23 = vshrl.u32 %v22, 7
    %v24 = vsub.s32 0, %v23
    %v25 = vrot.slane %v20, %v24
    %vm27 = vcmask 261120
    %v29 = vsel %vm27, %v15, 0
    %31 = vmatprep.subr.mxu0 0.0
    %32 = vmatpush1.msra.mxu0 0.0
    %33 = vmatprep.subr.mxu0 0.0
    %34 = vmatpush1.msra.mxu0 0.0
    %35 = vmatprep.subr.mxu0 0.0
    %36 = vmatpush1.msra.mxu0 0.0
    %37 = vmatprep.subr.mxu0 0.0
    %38 = vmatpush1.msra.mxu0 0.0
    %39 = vmatprep.subr.mxu0 0.0
    %40 = vmatpush1.msra.mxu0 0.0
    %41 = vmatprep.subr.mxu0 0.0
    %42 = vmatpush1.msra.mxu0 0.0
    %43 = vmatprep.subr.mxu0 0.0
    %44 = vmatpush1.msra.mxu0 0.0
    %45 = vmatprep.subr.mxu0 0.0
    %46 = vmatpush1.msra.mxu0 0.0
    %47 = vmatprep.subr.mxu0 0.0
    %48 = vmatpush1.msra.mxu0 0.0
    %49 = vmatprep.subr.mxu0 0.0
    %50 = vmatpush1.msra.mxu0 0.0
    %51 = vmatprep.subr.mxu0 0.0
    %52 = vmatpush1.msra.mxu0 0.0
    %53 = vmatprep.subr.mxu0 0.0
    %54 = vmatpush1.msra.mxu0 0.0
    %55 = vmatprep.subr.mxu0 0.0
    %56 = vmatpush1.msra.mxu0 %v19
    %57 = vmatprep.subr.mxu0 0.0
    %58 = vmatpush1.msra.mxu0 %v18
    %59 = vmatprep.subr.mxu0 0.0
    %60 = vmatpush1.msra.mxu0 %v17
    %61 = vmatprep.subr.mxu0 0.0
    %62 = vmatpush1.msra.mxu0 %v16
    %63 = vmatprep.subr.mxu0 0.0
    %64 = vmatpush2.msra.mxu0 0.0
    %65 = vmatprep.subr.mxu0 0.0
    %66 = vmatpush2.msra.mxu0 0.0
    %67 = vmatprep.subr.mxu0 0.0
    %68 = vmatpush2.msra.mxu0 0.0
    %69 = vmatprep.subr.mxu0 0.0
    %70 = vmatpush2.msra.mxu0 0.0
    %71 = vmatprep.subr.mxu0 0.0
    %72 = vmatpush2.msra.mxu0 0.0
    %73 = vmatprep.subr.mxu0 0.0
    %74 = vmatpush2.msra.mxu0 0.0
    %75 = vmatprep.subr.mxu0 0.0
    %76 = vmatpush2.msra.mxu0 0.0
    %77 = vmatprep.subr.mxu0 0.0
    %78 = vmatpush2.msra.mxu0 0.0
    %79 = vmatprep.subr.mxu0 0.0
    %80 = vmatpush2.msra.mxu0 0.0
    %81 = vmatprep.subr.mxu0 0.0
    %82 = vmatpush2.msra.mxu0 0.0
    %83 = vmatprep.subr.mxu0 0.0
    %84 = vmatpush2.msra.mxu0 0.0
    %85 = vmatprep.subr.mxu0 0.0
    %86 = vmatpush2.msra.mxu0 0.0
    %87 = vmatprep.subr.mxu0 0.0
    %88 = vmatpush2.msra.mxu0 0.0
    %89 = vmatprep.subr.mxu0 0.0
    %90 = vmatpush2.msra.mxu0 0.0
    %91 = vmatprep.subr.mxu0 0.0
    %92 = vmatpush2.msra.mxu0 0.0
    %93 = vmatprep.subr.mxu0 0.0
    %94 = vmatpush2.msra.mxu0 0.0
    %95 = vmatprep.mubr.f32.mxu0 0.0
    %96 = vmatmul.mubr.f32.gmra.mxu0 %v29
    %v97 = vpop.f32.mrf.mxu0
    %v98 = vadd.f32 %v25, %v97
    %v99 = vpop.f32.mrf.mxu0
    %100 = vdwg.mxu0
    %vm101 = vcmask 25600
    %102 = vst.msk [vmem:[#allocation2] sm:$0x3] %vm101, %v98
    // Predicated region
    $region14: #{tpu_custom_call.1} parent=1 // pred_check
      _
    $region15: #{tpu_custom_call.1} parent=1 // pred_check_branch
      %104 = sbr.rel (0) target = $region17
    $region16: #{tpu_custom_call.1} parent=1 // pred_region
      %s106 = ssub.s32 32, 32
      %107 = vsyncadd [#allocation3], %s106
      %s109 = sshll.u32 [#allocation2], 4
      %s110 = int_to_ptr.vmem [resolvable:$true] %s109
      %112 = dma.vmem_to_hbm [thread:$0]  %s110, 32, %s3, [#allocation3]
    $region17: #{tpu_custom_call.1} parent=1 // pred_fallthru
      _
    // Predicated region
    $region18: #{tpu_custom_call.1} parent=1 // pred_check
      _
    $region19: #{tpu_custom_call.1} parent=1 // pred_check_branch
      %114 = sbr.rel (0) target = $region21
    $region20: #{tpu_custom_call.1} parent=1 // pred_region
      %115 = dma.done [#allocation3], 32
    $region21: #{tpu_custom_call.1} parent=1 // pred_fallthru
      _
    %116 = vsyncpa [#allocation3], 1

</llo_original>
